<compile_context>
chip_gen: v7x
topology: tpu7x:2x2x1
jax: 0.10.0
libtpu: 0.0.40
codegen_flags: <defaults>
</compile_context>

<pallas_src>
import jax
import jax.numpy as jnp
from jax.experimental import pallas as pl
from jax.experimental.pallas import tpu as pltpu


def _normalization_kernel(mean_ref, inv_sigma_ref, lb_ref, ub_ref, lo_ref, uo_ref):
    mean = mean_ref[0, 0]
    inv_sigma = inv_sigma_ref[0, 0]
    lo_ref[...] = ((lb_ref[...] - mean) * inv_sigma).astype(lo_ref.dtype)
    uo_ref[...] = ((ub_ref[...] - mean) * inv_sigma).astype(uo_ref.dtype)


def _choose_lane(n):
    """Widest lane width (multiple of 128) that divides n; None if n % 128 != 0."""
    for cand in (1024, 512, 256, 128):
        if n % cand == 0:
            return cand
    return None


_TILE_BYTES = 2 * 1024 * 1024      # ~2 MiB per array per pipeline buffer
_MIN_PALLAS_BYTES = 1 << 20        # below ~1 MiB/array the launch overhead dominates


def dp_normalization_forward(lbounds, ubounds, mean, sigma, *, force_pallas=False):
    """Applies (x - mean) / sigma elementwise to both bounds.

    Lane-aligned, scalar-parameter inputs go through a Pallas TPU kernel; ragged
    sizes, per-channel parameters and tiny inputs use a single fused plain-JAX pass
    (no pad/slice extra HBM traffic).
    """
    assert lbounds.shape == ubounds.shape
    orig_shape = lbounds.shape
    dtype = lbounds.dtype
    n = int(lbounds.size)

    mean_arr = jnp.asarray(mean, jnp.float32)
    sigma_arr = jnp.asarray(sigma, jnp.float32)
    scalar_params = int(mean_arr.size) == 1 and int(sigma_arr.size) == 1

    lane = _choose_lane(n)
    big_enough = n * dtype.itemsize >= _MIN_PALLAS_BYTES
    use_pallas = scalar_params and lane is not None and (big_enough or force_pallas)

    if not use_pallas:
        # TODO(synk): per-channel mean/sigma and ragged element counts are handled by
        # this fused plain-JAX path (one HBM pass/array) rather than a dedicated
        # Pallas variant with broadcast parameters / masked 1-D stores.
        lo = (lbounds - jnp.asarray(mean, dtype)) / jnp.asarray(sigma, dtype)
        uo = (ubounds - jnp.asarray(mean, dtype)) / jnp.asarray(sigma, dtype)
        return lo, uo

    rows = n // lane
    lb2d = lbounds.reshape(rows, lane)
    ub2d = ubounds.reshape(rows, lane)

    # ~2 MiB per array per buffer, rounded down to a multiple of 8 sublanes.
    target_tile_r = max(8, (_TILE_BYTES // (lane * dtype.itemsize)) // 8 * 8)
    if rows <= 8:
        tile_r = rows                       # single full-extent block (tiny input)
    else:
        # At least 2 grid steps so v7x's two TensorCores both drive HBM, otherwise
        # cap near 2 MiB to amortize the ~0.35 us per-step pipeline overhead.
        half_r = ((pl.cdiv(rows, 2) + 7) // 8) * 8
        tile_r = min(target_tile_r, half_r)
    grid = (pl.cdiv(rows, tile_r),)

    # Precompute scalar parameters host-side: mean and 1/sigma (SMEM scalars).
    mean_smem = mean_arr.reshape(1, 1)
    inv_sigma_smem = (1.0 / sigma_arr).reshape(1, 1)

    out_shape2d = jax.ShapeDtypeStruct((rows, lane), dtype)
    tile_spec = pl.BlockSpec((tile_r, lane), lambda i: (i, 0))
    smem_spec = pl.BlockSpec(memory_space=pltpu.MemorySpace.SMEM)

    lo2d, uo2d = pl.pallas_call(
        _normalization_kernel,
        out_shape=(out_shape2d, out_shape2d),
        grid_spec=pltpu.PrefetchScalarGridSpec(
            num_scalar_prefetch=0,
            grid=grid,
            in_specs=[smem_spec, smem_spec, tile_spec, tile_spec],
            out_specs=[tile_spec, tile_spec],
        ),
        # lbounds -> lbounds_out, ubounds -> ubounds_out may be written in place
        # (realized when the caller donates the bound tensors at its jit boundary).
        input_output_aliases={2: 0, 3: 1},
        compiler_params=pltpu.CompilerParams(
            dimension_semantics=("parallel",),      # v7x: shard grid across both TCs
            vmem_limit_bytes=32 * 1024 * 1024,      # allow 2 MiB tiles on v5e too
        ),
    )(mean_smem, inv_sigma_smem, lb2d, ub2d)

    return lo2d.reshape(orig_shape), uo2d.reshape(orig_shape)


class DPShape:
    """Minimal JAX analogue of DP_Shape carrying concrete bounds."""

    def __init__(self, lbounds, ubounds):
        self.lbounds = lbounds
        self.ubounds = ubounds


class DPNormalization:
    """JAX/Pallas analogue of DP_Normalization."""

    def __init__(self, mean, sigma):
        # Deterministic synthetic parameters (MNIST normalization constants).
        self.mean = jnp.float32(mean)
        self.sigma = jnp.float32(sigma)

    def __call__(self, in_shape: DPShape, *, force_pallas=False) -> DPShape:
        lb, ub = dp_normalization_forward(
            in_shape.lbounds, in_shape.ubounds, self.mean, self.sigma,
            force_pallas=force_pallas)
        return DPShape(lb, ub)


if __name__ == "__main__":
    key = jax.random.PRNGKey(0)
    k1, k2, k3 = jax.random.split(key, 3)

    module = DPNormalization(mean=0.1307, sigma=0.3081)

    def make_bounds(k, shape):
        # DP_Shape.from_eps semantics: clamp(inputs +/- eps) to [0, 1].
        x = jax.random.uniform(k, shape, dtype=jnp.float32)
        eps = 0.1
        return jnp.clip(x - eps, 0.0, 1.0), jnp.clip(x + eps, 0.0, 1.0)

    def check(lb, ub, force):
        # Reference computed before the module call (inputs may be aliased in place).
        ref_lb = (lb - module.mean) / module.sigma
        ref_ub = (ub - module.mean) / module.sigma
        out = module(DPShape(lb, ub), force_pallas=force)
        jax.block_until_ready(out.lbounds)
        jax.block_until_ready(out.ubounds)
        assert out.lbounds.shape == lb.shape and out.ubounds.shape == ub.shape
        assert jnp.allclose(out.lbounds, ref_lb, atol=1e-5, rtol=1e-5)
        assert jnp.allclose(out.ubounds, ref_ub, atol=1e-5, rtol=1e-5)
        # Invariant from DP_Shape __init__: lbounds <= ubounds (sigma > 0 preserves it).
        assert bool(jnp.all(out.lbounds <= out.ubounds))

    # Primary small-shape test (per spec): force the Pallas kernel path.
    lb, ub = make_bounds(k1, (2, 4, 16, 16))
    check(lb, ub, force=True)

    # Larger aligned input: auto-selects Pallas (multi-step grid, 2 MiB-class tiles).
    lb, ub = make_bounds(k2, (2, 4, 256, 256))
    check(lb, ub, force=False)

    # Ragged element count: fused plain-JAX fallback (no pad / slice HBM passes).
    lb, ub = make_bounds(k3, (3, 5, 7))
    check(lb, ub, force=False)

    print("KERNEL_OK")
</pallas_src>

<mosaic_0001>
module attributes {stable_mosaic.version = 11 : i64} {
  func.func @_normalization_kernel(%arg0: i32, %arg1: memref<1x1xf32, #tpu.memory_space<smem>>, %arg2: memref<1x1xf32, #tpu.memory_space<smem>>, %arg3: memref<2x1024xf32, #tpu.memory_space<vmem>>, %arg4: memref<2x1024xf32, #tpu.memory_space<vmem>>, %arg5: memref<2x1024xf32, #tpu.memory_space<vmem>>, %arg6: memref<2x1024xf32, #tpu.memory_space<vmem>>) attributes {dimension_semantics = [#tpu.dimension_semantics<parallel>], iteration_bounds = array<i64: 1>, scalar_prefetch = 0 : i64, scratch_operands = 0 : i64, tpu.core_type = #tpu.core_type<tc>, window_params = [{transform_indices = @transform_0, window_bounds = array<i64: 1, 1>}, {transform_indices = @transform_1, window_bounds = array<i64: 1, 1>}, {transform_indices = @transform_2, window_bounds = array<i64: 2, 1024>}, {transform_indices = @transform_3, window_bounds = array<i64: 2, 1024>}, {transform_indices = @transform_4, window_bounds = array<i64: 2, 1024>}, {transform_indices = @transform_5, window_bounds = array<i64: 2, 1024>}]} {
    %c0 = arith.constant 0 : index
    %c0_0 = arith.constant 0 : index
    %0 = memref.load %arg1[%c0, %c0_0] : memref<1x1xf32, #tpu.memory_space<smem>>
    %c0_1 = arith.constant 0 : index
    %c0_2 = arith.constant 0 : index
    %1 = memref.load %arg2[%c0_1, %c0_2] : memref<1x1xf32, #tpu.memory_space<smem>>
    %c0_3 = arith.constant 0 : index
    %c0_4 = arith.constant 0 : index
    %2 = vector.load %arg3[%c0_3, %c0_4] : memref<2x1024xf32, #tpu.memory_space<vmem>>, vector<2x1024xf32>
    %3 = vector.broadcast %0 : f32 to vector<2x1024xf32>
    %4 = arith.subf %2, %3 : vector<2x1024xf32>
    %5 = vector.broadcast %1 : f32 to vector<2x1024xf32>
    %6 = arith.mulf %4, %5 : vector<2x1024xf32>
    %c0_5 = arith.constant 0 : index
    %c0_6 = arith.constant 0 : index
    %7 = vector.load %arg5[%c0_5, %c0_6] : memref<2x1024xf32, #tpu.memory_space<vmem>>, vector<2x1024xf32>
    tpu.vector_store %arg5[%c0_5, %c0_6], %6 {strides = array<i32>} : memref<2x1024xf32, #tpu.memory_space<vmem>>, vector<2x1024xf32>,
    %c0_7 = arith.constant 0 : index
    %c0_8 = arith.constant 0 : index
    %8 = vector.load %arg4[%c0_7, %c0_8] : memref<2x1024xf32, #tpu.memory_space<vmem>>, vector<2x1024xf32>
    %9 = vector.broadcast %0 : f32 to vector<2x1024xf32>
    %10 = arith.subf %8, %9 : vector<2x1024xf32>
    %11 = vector.broadcast %1 : f32 to vector<2x1024xf32>
    %12 = arith.mulf %10, %11 : vector<2x1024xf32>
    %c0_9 = arith.constant 0 : index
    %c0_10 = arith.constant 0 : index
    %13 = vector.load %arg6[%c0_9, %c0_10] : memref<2x1024xf32, #tpu.memory_space<vmem>>, vector<2x1024xf32>
    tpu.vector_store %arg6[%c0_9, %c0_10], %12 {strides = array<i32>} : memref<2x1024xf32, #tpu.memory_space<vmem>>, vector<2x1024xf32>,
    return
  }
  func.func @transform_0(%arg0: i32) -> (i32, i32) {
    %c0_i32 = arith.constant 0 : i32
    %c0_i32_0 = arith.constant 0 : i32
    %c0_i32_1 = arith.constant 0 : i32
    return %c0_i32, %c0_i32_0 : i32, i32
  }
  func.func @transform_1(%arg0: i32) -> (i32, i32) {
    %c0_i32 = arith.constant 0 : i32
    %c0_i32_0 = arith.constant 0 : i32
    %c0_i32_1 = arith.constant 0 : i32
    return %c0_i32, %c0_i32_0 : i32, i32
  }
  func.func @transform_2(%arg0: i32) -> (i32, i32) {
    %c0_i32 = arith.constant 0 : i32
    %c0_i32_0 = arith.constant 0 : i32
    return %arg0, %c0_i32 : i32, i32
  }
  func.func @transform_3(%arg0: i32) -> (i32, i32) {
    %c0_i32 = arith.constant 0 : i32
    %c0_i32_0 = arith.constant 0 : i32
    return %arg0, %c0_i32 : i32, i32
  }
  func.func @transform_4(%arg0: i32) -> (i32, i32) {
    %c0_i32 = arith.constant 0 : i32
    %c0_i32_0 = arith.constant 0 : i32
    return %arg0, %c0_i32 : i32, i32
  }
  func.func @transform_5(%arg0: i32) -> (i32, i32) {
    %c0_i32 = arith.constant 0 : i32
    %c0_i32_0 = arith.constant 0 : i32
    return %arg0, %c0_i32 : i32, i32
  }
}

</mosaic_0001>

<llo_original>
// kernel: tpu_custom_call.1
$region0: #{tpu_custom_call.1}
  #allocation0 [shape = 'u32[]', space=smem, size = 0x4, offset = 0x4, fixed_abs, tag = 'smem constant byte address 0x4 - core index']
  #allocation1 [shape = 'u32[144,128]{1,0:T(1,128)}', space=vmem, size = 0x12000, scoped, tag = 'internal scratch']
  #allocation2 [shape = 'f32[1,1]{1,0:T(1,128)S(6)}', space=smem, size = 0x200, scoped, tag = 'scoped memory for tpu_custom_call.1']
  #allocation3 [shape = 'f32[1,1]{1,0:T(1,128)S(6)}', space=smem, size = 0x200, scoped, tag = 'scoped memory for tpu_custom_call.1']
  %s0 = inlined_call_operand.<no memory space> [shape: f32[1,1], index: 0, kind: input, shape index: {}]
  %s1 = inlined_call_operand.<no memory space> [shape: f32[1,1], index: 1, kind: input, shape index: {}]
  %s2 = inlined_call_operand.hbm [shape: f32[2,1024], index: 2, kind: input, shape index: {}, may-alias: {2,4}]
  %s3 = inlined_call_operand.hbm [shape: f32[2,1024], index: 3, kind: input, shape index: {}, may-alias: {3,5}]
  %s4 = inlined_call_operand.hbm [shape: f32[2,1024], index: 4, kind: output, shape index: {0}, may-alias: {2,4}]
  %s5 = inlined_call_operand.hbm [shape: f32[2,1024], index: 5, kind: output, shape index: {1}, may-alias: {3,5}]
  %6 = xla_tuple %s4, %s5
  %s7 = sld [smem:[#allocation0]]
  $region42: #{tpu_custom_call.1} parent=0
    _
  %s9 = ssub.s32 1, %s7
  %s10 = scalar_select 0, %s9, %s7
  %11 = sst [smem:[#allocation2]] %s0
  %12 = sst [smem:[#allocation3]] %s1
  $region1: #{tpu_custom_call.1} parent=0
    #allocation4 [shape = 'u8[8192]{0}', space=vmem, size = 0x2000, scoped, tag = 'input window, operand 2, single buffered']
    #allocation5 [shape = 's32[1]{0}', space=sflag, size = 0x4, scoped, tag = 'scoped memory for tpu_custom_call.1']
    #allocation6 [shape = 's32[1]{0}', space=sflag, size = 0x4, scoped, tag = 'scoped memory for tpu_custom_call.1']
    #allocation7 [shape = 'u8[8192]{0}', space=vmem, size = 0x2000, scoped, tag = 'input window, operand 3, single buffered']
    #allocation8 [shape = 's32[1]{0}', space=sflag, size = 0x4, scoped, tag = 'scoped memory for tpu_custom_call.1']
    #allocation9 [shape = 'u8[8192]{0}', space=vmem, size = 0x2000, scoped, tag = 'output window, operand 0, single buffered']
    #allocation10 [shape = 'u8[8192]{0}', space=vmem, size = 0x2000, scoped, tag = 'output window, operand 1, single buffered']
    #allocation11 [shape = 's32[1]{0}', space=sflag, size = 0x4, scoped, tag = 'scoped memory for tpu_custom_call.1']
    %13 = vsyncpa [#allocation5], 0
    %14 = vsyncpa [#allocation8], 0
    %15 = vsyncpa [#allocation6], 0
    %16 = vsyncpa [#allocation11], 0
    // Predicated region
    $region2: #{tpu_custom_call.1} parent=1 // pred_check
      _
    $region3: #{tpu_custom_call.1} parent=1 // pred_check_branch
      %18 = sbr.rel (0) target = $region5
    $region4: #{tpu_custom_call.1} parent=1 // pred_region
      _
    $region5: #{tpu_custom_call.1} parent=1 // pred_fallthru
      _
    // Predicated region
    $region6: #{tpu_custom_call.1} parent=1 // pred_check
      _
    $region7: #{tpu_custom_call.1} parent=1 // pred_check_branch
      %20 = sbr.rel (0) target = $region9
    $region8: #{tpu_custom_call.1} parent=1 // pred_region
      _
    $region9: #{tpu_custom_call.1} parent=1 // pred_fallthru
      _
    // Predicated region
    $region10: #{tpu_custom_call.1} parent=1 // pred_check
      _
    $region11: #{tpu_custom_call.1} parent=1 // pred_check_branch
      %22 = sbr.rel (0) target = $region13
    $region12: #{tpu_custom_call.1} parent=1 // pred_region
      %s24 = ssub.s32 256, 256
      %25 = vsyncadd [#allocation5], %s24
      %s27 = sshll.u32 [#allocation4], 4
      %s28 = int_to_ptr.vmem [resolvable:$true] %s27
      %30 = dma.hbm_to_vmem [thread:$0]  %s2, 256, %s28, [#allocation5]
    $region13: #{tpu_custom_call.1} parent=1 // pred_fallthru
      _
    // Predicated region
    $region14: #{tpu_custom_call.1} parent=1 // pred_check
      _
    $region15: #{tpu_custom_call.1} parent=1 // pred_check_branch
      %32 = sbr.rel (0) target = $region17
    $region16: #{tpu_custom_call.1} parent=1 // pred_region
      %s34 = ssub.s32 256, 256
      %35 = vsyncadd [#allocation8], %s34
      %s37 = sshll.u32 [#allocation7], 4
      %s38 = int_to_ptr.vmem [resolvable:$true] %s37
      %40 = dma.hbm_to_vmem [thread:$0]  %s3, 256, %s38, [#allocation8]
    $region17: #{tpu_custom_call.1} parent=1 // pred_fallthru
      _
    // Predicated region
    $region18: #{tpu_custom_call.1} parent=1 // pred_check
      _
    $region19: #{tpu_custom_call.1} parent=1 // pred_check_branch
      %42 = sbr.rel (0) target = $region21
    $region20: #{tpu_custom_call.1} parent=1 // pred_region
      %43 = dma.done [#allocation5], 256
    $region21: #{tpu_custom_call.1} parent=1 // pred_fallthru
      _
    // Predicated region
    $region22: #{tpu_custom_call.1} parent=1 // pred_check
      _
    $region23: #{tpu_custom_call.1} parent=1 // pred_check_branch
      %45 = sbr.rel (0) target = $region25
    $region24: #{tpu_custom_call.1} parent=1 // pred_region
      %46 = dma.done [#allocation8], 256
    $region25: #{tpu_custom_call.1} parent=1 // pred_fallthru
      _
    %s47 = sld [smem:[#allocation2]]
    %s48 = sld [smem:[#allocation3]]
    %v49 = vld [vmem:[#allocation4] sm:$0xff]
    %v50 = vld [vmem:[#allocation4 + $0x8] sm:$0xff]
    %v51 = vstv %s47
    %v52 = vsub.f32 %v49, %v51
    %v53 = vsub.f32 %v50, %v51
    %v54 = vstv %s48
    %v55 = vmul.f32 %v52, %v54
    %v56 = vmul.f32 %v53, %v54
    %57 = vst [vmem:[#allocation9] sm:$0xff] %v55
    %58 = vst [vmem:[#allocation9 + $0x8] sm:$0xff] %v56
    %v59 = vld [vmem:[#allocation7] sm:$0xff]
    %v60 = vld [vmem:[#allocation7 + $0x8] sm:$0xff]
    %v61 = vsub.f32 %v59, %v51
    %v62 = vsub.f32 %v60, %v51
    %v63 = vmul.f32 %v61, %v54
    %v64 = vmul.f32 %v62, %v54
    %65 = vst [vmem:[#allocation10] sm:$0xff] %v63
    %66 = vst [vmem:[#allocation10 + $0x8] sm:$0xff] %v64
    // Predicated region
    $region26: #{tpu_custom_call.1} parent=1 // pred_check
      _
    $region27: #{tpu_custom_call.1} parent=1 // pred_check_branch
      %68 = sbr.rel (0) target = $region29
    $region28: #{tpu_custom_call.1} parent=1 // pred_region
      %s70 = ssub.s32 256, 256
      %71 = vsyncadd [#allocation6], %s70
      %s73 = sshll.u32 [#allocation9], 4
      %s74 = int_to_ptr.vmem [resolvable:$true] %s73
      %76 = dma.vmem_to_hbm [thread:$0]  %s74, 256, %s4, [#allocation6]
    $region29: #{tpu_custom_call.1} parent=1 // pred_fallthru
      _
    // Predicated region
    $region30: #{tpu_custom_call.1} parent=1 // pred_check
      _
    $region31: #{tpu_custom_call.1} parent=1 // pred_check_branch
      %78 = sbr.rel (0) target = $region33
    $region32: #{tpu_custom_call.1} parent=1 // pred_region
      %s80 = ssub.s32 256, 256
      %81 = vsyncadd [#allocation11], %s80
      %s83 = sshll.u32 [#allocation10], 4
      %s84 = int_to_ptr.vmem [resolvable:$true] %s83
      %86 = dma.vmem_to_hbm [thread:$0]  %s84, 256, %s5, [#allocation11]
    $region33: #{tpu_custom_call.1} parent=1 // pred_fallthru
      _
    // Predicated region
    $region34: #{tpu_custom_call.1} parent=1 // pred_check
      _
    $region35: #{tpu_custom_call.1} parent=1 // pred_check_branch
      %88 = sbr.rel (0) target = $region37
    $region36: #{tpu_custom_call.1} parent=1 // pred_region
      %89 = dma.done [#allocation6], 256
    $region37: #{tpu_custom_call.1} parent=1 // pred_fallthru
      _
    // Predicated region
    $region38: #{tpu_custom_call.1} parent=1 // pred_check
      _
    $region39: #{tpu_custom_call.1} parent=1 // pred_check_branch
      %91 = sbr.rel (0) target = $region41
    $region40: #{tpu_custom_call.1} parent=1 // pred_region
      %92 = dma.done [#allocation11], 256
    $region41: #{tpu_custom_call.1} parent=1 // pred_fallthru
      _
    %93 = vsyncpa [#allocation5], 1
    %94 = vsyncpa [#allocation8], 1
    %95 = vsyncpa [#allocation6], 1
    %96 = vsyncpa [#allocation11], 1

</llo_original>
